<compile_context>
chip_gen: v5e
topology: v5e:2x2
jax: 0.10.0
libtpu: 0.0.40
codegen_flags: <defaults>
</compile_context>

<pallas_src>
import functools

import jax
import jax.numpy as jnp
from jax import lax
from jax.experimental import pallas as pl
from jax.experimental.pallas import tpu as pltpu

_LANE = 128
_SUBLANE = 8


def _round_up(x, m):
    return ((x + m - 1) // m) * m


def _fcn_kernel(x_ref, w0_ref, b0_ref, wh_ref, bh_ref, we_ref, be_ref, o_ref,
                *, n_hidden_layers):
    # First layer: Linear(N_INPUT -> H_PAD) + tanh.
    h = jnp.tanh(
        jnp.dot(x_ref[...], w0_ref[...], preferred_element_type=jnp.float32)
        + b0_ref[...]
    )

    # Hidden layers: (N_LAYERS - 1) x [Linear(H_PAD -> H_PAD) + tanh].
    if n_hidden_layers <= 4:
        # Shallow: static unroll keeps everything visible to the LLO scheduler.
        for layer in range(n_hidden_layers):
            h = jnp.tanh(
                jnp.dot(h, wh_ref[layer], preferred_element_type=jnp.float32)
                + bh_ref[layer]
            )
    else:
        # Deep: fori_loop bounds vreg live ranges / avoids unroll blow-up.
        def body(layer, h_in):
            return jnp.tanh(
                jnp.dot(h_in, wh_ref[layer],
                        preferred_element_type=jnp.float32)
                + bh_ref[layer]
            )
        h = lax.fori_loop(0, n_hidden_layers, body, h)

    # Output layer: Linear(H_PAD -> N_OUT_PAD), no activation. Lane-dense store.
    o_ref[...] = (
        jnp.dot(h, we_ref[...], preferred_element_type=jnp.float32)
        + be_ref[...]
    ).astype(o_ref.dtype)


def fcn_forward(x, padded_params, *, n_layers, n_output, tile_b=512):
    """Fused FCN forward pass. `padded_params` come from pad_fcn_params."""
    w0, b0 = padded_params["w0"], padded_params["b0"]
    wh, bh = padded_params["wh"], padded_params["bh"]
    we, be = padded_params["we"], padded_params["be"]

    B, n_in = x.shape
    h_pad = w0.shape[1]
    n_out_pad = we.shape[1]
    n_hidden_layers = n_layers - 1

    # Guard n_layers == 1: never hand Mosaic a zero-extent block.
    if wh.shape[0] == 0:
        wh = jnp.zeros((1, h_pad, h_pad), w0.dtype)
        bh = jnp.zeros((1, 1, h_pad), w0.dtype)
    n_stack = wh.shape[0]

    # Batch tiling: tile_b a multiple of 8, pad B so every block is full.
    tile_b = max(_SUBLANE, min(int(tile_b), _round_up(B, _SUBLANE)))
    tile_b = _round_up(tile_b, _SUBLANE)
    b_pad = _round_up(B, tile_b)
    if b_pad != B:
        x = jnp.pad(x, ((0, b_pad - B), (0, 0)))
    num_tiles = b_pad // tile_b

    kernel = functools.partial(_fcn_kernel, n_hidden_layers=n_hidden_layers)

    flops = 2 * b_pad * (n_in * h_pad
                         + n_hidden_layers * h_pad * h_pad
                         + h_pad * n_out_pad)
    transcendentals = b_pad * h_pad * n_layers
    bytes_accessed = 4 * (x.size + w0.size + b0.size + wh.size + bh.size
                          + we.size + be.size + b_pad * n_out_pad)

    out_padded = pl.pallas_call(
        kernel,
        out_shape=jax.ShapeDtypeStruct((b_pad, n_out_pad), x.dtype),
        grid=(num_tiles,),
        in_specs=[
            # Only x is pipelined over the grid; weights/biases stay resident.
            pl.BlockSpec((tile_b, n_in), lambda i: (i, 0)),
            pl.BlockSpec((n_in, h_pad), lambda i: (0, 0)),
            pl.BlockSpec((1, h_pad), lambda i: (0, 0)),
            pl.BlockSpec((n_stack, h_pad, h_pad), lambda i: (0, 0, 0)),
            pl.BlockSpec((n_stack, 1, h_pad), lambda i: (0, 0, 0)),
            pl.BlockSpec((h_pad, n_out_pad), lambda i: (0, 0)),
            pl.BlockSpec((1, n_out_pad), lambda i: (0, 0)),
        ],
        out_specs=pl.BlockSpec((tile_b, n_out_pad), lambda i: (i, 0)),
        compiler_params=pltpu.CompilerParams(
            dimension_semantics=("parallel",)),
        cost_estimate=pl.CostEstimate(
            flops=flops,
            transcendentals=transcendentals,
            bytes_accessed=bytes_accessed),
    )(x, w0, b0, wh, bh, we, be)

    # Strip the batch and lane padding outside the kernel.
    return out_padded[:B, :n_output]


def init_fcn_params(key, n_input, n_output, n_hidden, n_layers):
    """PyTorch nn.Linear default init (uniform(-1/sqrt(fan_in), 1/sqrt(fan_in)));
    weights stored as (in_features, out_features) so y = x @ W + b."""
    keys = jax.random.split(key, 6)

    def uniform(k, shape, fan_in):
        bound = 1.0 / jnp.sqrt(jnp.float32(fan_in))
        return jax.random.uniform(k, shape, jnp.float32, -bound, bound)

    n_hidden_layers = max(n_layers - 1, 0)
    return {
        "w0": uniform(keys[0], (n_input, n_hidden), n_input),
        "b0": uniform(keys[1], (1, n_hidden), n_input),
        "wh": uniform(keys[2], (n_hidden_layers, n_hidden, n_hidden), n_hidden),
        "bh": uniform(keys[3], (n_hidden_layers, 1, n_hidden), n_hidden),
        "we": uniform(keys[4], (n_hidden, n_output), n_hidden),
        "be": uniform(keys[5], (1, n_output), n_hidden),
    }


def pad_fcn_params(params, *, lane=_LANE):
    """Zero-pad hidden/output feature dims to lane width, ONCE, outside the
    kernel. Exact: padded hidden channels see zero weights and zero bias, so
    tanh(0)=0 and the zero rows of downstream weights never contribute."""
    n_hidden = params["w0"].shape[1]
    n_output = params["we"].shape[1]
    h_pad = _round_up(max(n_hidden, 1), lane)
    o_pad = _round_up(max(n_output, 1), lane)
    dh = h_pad - n_hidden
    do = o_pad - n_output
    return {
        "w0": jnp.pad(params["w0"], ((0, 0), (0, dh))),
        "b0": jnp.pad(params["b0"], ((0, 0), (0, dh))),
        "wh": jnp.pad(params["wh"], ((0, 0), (0, dh), (0, dh))),
        "bh": jnp.pad(params["bh"], ((0, 0), (0, 0), (0, dh))),
        "we": jnp.pad(params["we"], ((0, dh), (0, do))),
        "be": jnp.pad(params["be"], ((0, 0), (0, do))),
    }


def fcn_reference(x, params, *, n_layers):
    """Pure-JAX reference of the same forward pass (unpadded params)."""
    h = jnp.tanh(x @ params["w0"] + params["b0"])
    for layer in range(n_layers - 1):
        h = jnp.tanh(h @ params["wh"][layer] + params["bh"][layer])
    return h @ params["we"] + params["be"]


if __name__ == "__main__":
    # Small, forward-implied shapes (PINN-style FCN).
    N_INPUT, N_OUTPUT, N_HIDDEN, N_LAYERS = 2, 1, 32, 3
    BATCH = 8

    print("Input size of the linear layer:", N_HIDDEN)  # mirrors module __init__

    key = jax.random.PRNGKey(0)
    k_params, k_x = jax.random.split(key)
    params = init_fcn_params(k_params, N_INPUT, N_OUTPUT, N_HIDDEN, N_LAYERS)
    padded_params = pad_fcn_params(params)
    x = jax.random.normal(k_x, (BATCH, N_INPUT), dtype=jnp.float32)

    out = fcn_forward(x, padded_params, n_layers=N_LAYERS, n_output=N_OUTPUT)
    out = jax.block_until_ready(out)

    ref = fcn_reference(x, params, n_layers=N_LAYERS)
    assert out.shape == (BATCH, N_OUTPUT)
    assert jnp.allclose(out, ref, atol=1e-5, rtol=1e-5)

    print("KERNEL_OK")
</pallas_src>

<mosaic_0001>
module attributes {stable_mosaic.version = 11 : i64} {
  func.func @_fcn_kernel(%arg0: i32, %arg1: memref<8x2xf32, #tpu.memory_space<vmem>>, %arg2: memref<2x128xf32, #tpu.memory_space<vmem>>, %arg3: memref<1x128xf32, #tpu.memory_space<vmem>>, %arg4: memref<2x128x128xf32, #tpu.memory_space<vmem>>, %arg5: memref<2x1x128xf32, #tpu.memory_space<vmem>>, %arg6: memref<128x128xf32, #tpu.memory_space<vmem>>, %arg7: memref<1x128xf32, #tpu.memory_space<vmem>>, %arg8: memref<8x128xf32, #tpu.memory_space<vmem>>) attributes {dimension_semantics = [#tpu.dimension_semantics<parallel>], iteration_bounds = array<i64: 1>, scalar_prefetch = 0 : i64, scratch_operands = 0 : i64, tpu.core_type = #tpu.core_type<tc>, window_params = [{transform_indices = @transform_0, window_bounds = array<i64: 8, 2>}, {pipeline_mode = #tpu.pipeline_mode<synchronous>, transform_indices = @transform_1, window_bounds = array<i64: 2, 128>}, {pipeline_mode = #tpu.pipeline_mode<synchronous>, transform_indices = @transform_2, window_bounds = array<i64: 1, 128>}, {pipeline_mode = #tpu.pipeline_mode<synchronous>, transform_indices = @transform_3, window_bounds = array<i64: 2, 128, 128>}, {pipeline_mode = #tpu.pipeline_mode<synchronous>, transform_indices = @transform_4, window_bounds = array<i64: 2, 1, 128>}, {pipeline_mode = #tpu.pipeline_mode<synchronous>, transform_indices = @transform_5, window_bounds = array<i64: 128, 128>}, {pipeline_mode = #tpu.pipeline_mode<synchronous>, transform_indices = @transform_6, window_bounds = array<i64: 1, 128>}, {transform_indices = @transform_7, window_bounds = array<i64: 8, 128>}]} {
    %c0 = arith.constant 0 : index
    %c0_0 = arith.constant 0 : index
    %0 = vector.load %arg1[%c0, %c0_0] : memref<8x2xf32, #tpu.memory_space<vmem>>, vector<8x2xf32>
    %c0_1 = arith.constant 0 : index
    %c0_2 = arith.constant 0 : index
    %1 = vector.load %arg2[%c0_1, %c0_2] : memref<2x128xf32, #tpu.memory_space<vmem>>, vector<2x128xf32>
    %cst = arith.constant dense<0.000000e+00> : vector<8x128xf32>
    %2 = tpu.matmul %0, %1, %cst {dimension_numbers = #tpu.dot_dimension_numbers<[1], [0], [0], [1], [0, 0, 1, 1], [], []>} : vector<8x2xf32>, vector<2x128xf32>, vector<8x128xf32> -> vector<8x128xf32>
    %c0_3 = arith.constant 0 : index
    %c0_4 = arith.constant 0 : index
    %3 = vector.load %arg3[%c0_3, %c0_4] : memref<1x128xf32, #tpu.memory_space<vmem>>, vector<1x128xf32>
    %4 = vector.broadcast %3 : vector<1x128xf32> to vector<8x128xf32>
    %5 = arith.addf %2, %4 : vector<8x128xf32>
    %6 = math.tanh %5 : vector<8x128xf32>
    %c0_5 = arith.constant 0 : index
    %c0_6 = arith.constant 0 : index
    %c0_7 = arith.constant 0 : index
    %7 = vector.load %arg4[%c0_5, %c0_6, %c0_7] : memref<2x128x128xf32, #tpu.memory_space<vmem>>, vector<1x128x128xf32>
    %8 = vector.shape_cast %7 : vector<1x128x128xf32> to vector<128x128xf32>
    %cst_8 = arith.constant dense<0.000000e+00> : vector<8x128xf32>
    %9 = tpu.matmul %6, %8, %cst_8 {dimension_numbers = #tpu.dot_dimension_numbers<[1], [0], [0], [1], [0, 0, 1, 1], [], []>} : vector<8x128xf32>, vector<128x128xf32>, vector<8x128xf32> -> vector<8x128xf32>
    %c0_9 = arith.constant 0 : index
    %c0_10 = arith.constant 0 : index
    %c0_11 = arith.constant 0 : index
    %10 = vector.load %arg5[%c0_9, %c0_10, %c0_11] : memref<2x1x128xf32, #tpu.memory_space<vmem>>, vector<1x1x128xf32>
    %11 = vector.shape_cast %10 : vector<1x1x128xf32> to vector<1x128xf32>
    %12 = vector.broadcast %11 : vector<1x128xf32> to vector<8x128xf32>
    %13 = arith.addf %9, %12 : vector<8x128xf32>
    %14 = math.tanh %13 : vector<8x128xf32>
    %c1 = arith.constant 1 : index
    %c0_12 = arith.constant 0 : index
    %c0_13 = arith.constant 0 : index
    %15 = vector.load %arg4[%c1, %c0_12, %c0_13] : memref<2x128x128xf32, #tpu.memory_space<vmem>>, vector<1x128x128xf32>
    %16 = vector.shape_cast %15 : vector<1x128x128xf32> to vector<128x128xf32>
    %cst_14 = arith.constant dense<0.000000e+00> : vector<8x128xf32>
    %17 = tpu.matmul %14, %16, %cst_14 {dimension_numbers = #tpu.dot_dimension_numbers<[1], [0], [0], [1], [0, 0, 1, 1], [], []>} : vector<8x128xf32>, vector<128x128xf32>, vector<8x128xf32> -> vector<8x128xf32>
    %c1_15 = arith.constant 1 : index
    %c0_16 = arith.constant 0 : index
    %c0_17 = arith.constant 0 : index
    %18 = vector.load %arg5[%c1_15, %c0_16, %c0_17] : memref<2x1x128xf32, #tpu.memory_space<vmem>>, vector<1x1x128xf32>
    %19 = vector.shape_cast %18 : vector<1x1x128xf32> to vector<1x128xf32>
    %20 = vector.broadcast %19 : vector<1x128xf32> to vector<8x128xf32>
    %21 = arith.addf %17, %20 : vector<8x128xf32>
    %22 = math.tanh %21 : vector<8x128xf32>
    %c0_18 = arith.constant 0 : index
    %c0_19 = arith.constant 0 : index
    %23 = vector.load %arg6[%c0_18, %c0_19] : memref<128x128xf32, #tpu.memory_space<vmem>>, vector<128x128xf32>
    %cst_20 = arith.constant dense<0.000000e+00> : vector<8x128xf32>
    %24 = tpu.matmul %22, %23, %cst_20 {dimension_numbers = #tpu.dot_dimension_numbers<[1], [0], [0], [1], [0, 0, 1, 1], [], []>} : vector<8x128xf32>, vector<128x128xf32>, vector<8x128xf32> -> vector<8x128xf32>
    %c0_21 = arith.constant 0 : index
    %c0_22 = arith.constant 0 : index
    %25 = vector.load %arg7[%c0_21, %c0_22] : memref<1x128xf32, #tpu.memory_space<vmem>>, vector<1x128xf32>
    %26 = vector.broadcast %25 : vector<1x128xf32> to vector<8x128xf32>
    %27 = arith.addf %24, %26 : vector<8x128xf32>
    %c0_23 = arith.constant 0 : index
    %c0_24 = arith.constant 0 : index
    %28 = vector.load %arg8[%c0_23, %c0_24] : memref<8x128xf32, #tpu.memory_space<vmem>>, vector<8x128xf32>
    tpu.vector_store %arg8[%c0_23, %c0_24], %27 {strides = array<i32>} : memref<8x128xf32, #tpu.memory_space<vmem>>, vector<8x128xf32>,
    return
  }
  func.func @transform_0(%arg0: i32) -> (i32, i32) {
    %c0_i32 = arith.constant 0 : i32
    %c0_i32_0 = arith.constant 0 : i32
    return %arg0, %c0_i32 : i32, i32
  }
  func.func @transform_1(%arg0: i32) -> (i32, i32) {
    %c0_i32 = arith.constant 0 : i32
    %c0_i32_0 = arith.constant 0 : i32
    %c0_i32_1 = arith.constant 0 : i32
    return %c0_i32, %c0_i32_0 : i32, i32
  }
  func.func @transform_2(%arg0: i32) -> (i32, i32) {
    %c0_i32 = arith.constant 0 : i32
    %c0_i32_0 = arith.constant 0 : i32
    %c0_i32_1 = arith.constant 0 : i32
    return %c0_i32, %c0_i32_0 : i32, i32
  }
  func.func @transform_3(%arg0: i32) -> (i32, i32, i32) {
    %c0_i32 = arith.constant 0 : i32
    %c0_i32_0 = arith.constant 0 : i32
    %c0_i32_1 = arith.constant 0 : i32
    %c0_i32_2 = arith.constant 0 : i32
    return %c0_i32, %c0_i32_0, %c0_i32_1 : i32, i32, i32
  }
  func.func @transform_4(%arg0: i32) -> (i32, i32, i32) {
    %c0_i32 = arith.constant 0 : i32
    %c0_i32_0 = arith.constant 0 : i32
    %c0_i32_1 = arith.constant 0 : i32
    %c0_i32_2 = arith.constant 0 : i32
    return %c0_i32, %c0_i32_0, %c0_i32_1 : i32, i32, i32
  }
  func.func @transform_5(%arg0: i32) -> (i32, i32) {
    %c0_i32 = arith.constant 0 : i32
    %c0_i32_0 = arith.constant 0 : i32
    %c0_i32_1 = arith.constant 0 : i32
    return %c0_i32, %c0_i32_0 : i32, i32
  }
  func.func @transform_6(%arg0: i32) -> (i32, i32) {
    %c0_i32 = arith.constant 0 : i32
    %c0_i32_0 = arith.constant 0 : i32
    %c0_i32_1 = arith.constant 0 : i32
    return %c0_i32, %c0_i32_0 : i32, i32
  }
  func.func @transform_7(%arg0: i32) -> (i32, i32) {
    %c0_i32 = arith.constant 0 : i32
    %c0_i32_0 = arith.constant 0 : i32
    return %arg0, %c0_i32 : i32, i32
  }
}

</mosaic_0001>

<llo_original>
// kernel: tpu_custom_call.1
$region0: #{tpu_custom_call.1}
  #allocation0 [shape = 'u32[]', space=smem, size = 0x4, offset = 0x4, fixed_abs, tag = 'smem constant byte address 0x4 - core index']
  #allocation1 [shape = 'u32[72,128]{1,0:T(1,128)}', space=vmem, size = 0x9000, scoped, tag = 'internal scratch']
  %s0 = inlined_call_operand.vmem [shape: f32[8,2], index: 0, kind: input, shape index: {}]
  %s1 = inlined_call_operand.vmem [shape: f32[2,128], index: 1, kind: input, shape index: {}]
  %s2 = inlined_call_operand.vmem [shape: f32[1,128], index: 2, kind: input, shape index: {}]
  %s3 = inlined_call_operand.hbm [shape: f32[2,128,128], index: 3, kind: input, shape index: {}]
  %s4 = inlined_call_operand.vmem [shape: f32[2,1,128], index: 4, kind: input, shape index: {}]
  %s5 = inlined_call_operand.hbm [shape: f32[128,128], index: 5, kind: input, shape index: {}]
  %s6 = inlined_call_operand.vmem [shape: f32[1,128], index: 6, kind: input, shape index: {}]
  %s7 = inlined_call_operand.hbm [shape: f32[8,128], index: 7, kind: output, shape index: {}]
  %s8 = sld [smem:[#allocation0]]
  $region46: #{tpu_custom_call.1} parent=0
    _
  %s10 = ssub.s32 1, %s8
  %s11 = scalar_select 0, %s10, %s8
  $region1: #{tpu_custom_call.1} parent=0
    #allocation2 [shape = 'u8[131072]{0}', space=vmem, size = 0x20000, scoped, tag = 'input window, operand 3, single buffered']
    #allocation3 [shape = 's32[1]{0}', space=sflag, size = 0x4, scoped, tag = 'scoped memory for tpu_custom_call.1']
    #allocation4 [shape = 's32[1]{0}', space=sflag, size = 0x4, scoped, tag = 'scoped memory for tpu_custom_call.1']
    #allocation5 [shape = 'u8[65536]{0}', space=vmem, size = 0x10000, scoped, tag = 'input window, operand 5, single buffered']
    #allocation6 [shape = 's32[1]{0}', space=sflag, size = 0x4, scoped, tag = 'scoped memory for tpu_custom_call.1']
    #allocation7 [shape = 'u8[4096]{0}', space=vmem, size = 0x1000, scoped, tag = 'output window, operand 0, single buffered']
    %12 = vsyncpa [#allocation3], 0
    %13 = vsyncpa [#allocation6], 0
    %14 = vsyncpa [#allocation4], 0
    // Predicated region
    $region2: #{tpu_custom_call.1} parent=1 // pred_check
      _
    $region3: #{tpu_custom_call.1} parent=1 // pred_check_branch
      %16 = sbr.rel (0) target = $region5
    $region4: #{tpu_custom_call.1} parent=1 // pred_region
      _
    $region5: #{tpu_custom_call.1} parent=1 // pred_fallthru
      _
    // Predicated region
    $region6: #{tpu_custom_call.1} parent=1 // pred_check
      _
    $region7: #{tpu_custom_call.1} parent=1 // pred_check_branch
      %18 = sbr.rel (0) target = $region9
    $region8: #{tpu_custom_call.1} parent=1 // pred_region
      _
    $region9: #{tpu_custom_call.1} parent=1 // pred_fallthru
      _
    // Predicated region
    $region10: #{tpu_custom_call.1} parent=1 // pred_check
      _
    $region11: #{tpu_custom_call.1} parent=1 // pred_check_branch
      %20 = sbr.rel (0) target = $region13
    $region12: #{tpu_custom_call.1} parent=1 // pred_region
      _
    $region13: #{tpu_custom_call.1} parent=1 // pred_fallthru
      _
    // Predicated region
    $region14: #{tpu_custom_call.1} parent=1 // pred_check
      _
    $region15: #{tpu_custom_call.1} parent=1 // pred_check_branch
      %22 = sbr.rel (0) target = $region17
    $region16: #{tpu_custom_call.1} parent=1 // pred_region
      %24 = vsyncadd [#allocation3], 0
      %s25 = sshll.u32 %s3, 4
      %s26 = int_to_ptr.hbm [resolvable:$true] %s25
      %s27 = sshll.u32 [#allocation2], 4
      %s28 = int_to_ptr.vmem [resolvable:$true] %s27
      %33 = dma.hbm_to_vmem [thread:$0]  %s26, 4096, %s28, [#allocation3], 128, 128, 8
    $region17: #{tpu_custom_call.1} parent=1 // pred_fallthru
      _
    // Predicated region
    $region18: #{tpu_custom_call.1} parent=1 // pred_check
      _
    $region19: #{tpu_custom_call.1} parent=1 // pred_check_branch
      %35 = sbr.rel (0) target = $region21
    $region20: #{tpu_custom_call.1} parent=1 // pred_region
      _
    $region21: #{tpu_custom_call.1} parent=1 // pred_fallthru
      _
    // Predicated region
    $region22: #{tpu_custom_call.1} parent=1 // pred_check
      _
    $region23: #{tpu_custom_call.1} parent=1 // pred_check_branch
      %37 = sbr.rel (0) target = $region25
    $region24: #{tpu_custom_call.1} parent=1 // pred_region
      %39 = vsyncadd [#allocation6], 0
      %s40 = sshll.u32 %s5, 4
      %s41 = int_to_ptr.hbm [resolvable:$true] %s40
      %s42 = sshll.u32 [#allocation5], 4
      %s43 = int_to_ptr.vmem [resolvable:$true] %s42
      %48 = dma.hbm_to_vmem [thread:$0]  %s41, 2048, %s43, [#allocation6], 128, 128, 8
    $region25: #{tpu_custom_call.1} parent=1 // pred_fallthru
      _
    // Predicated region
    $region26: #{tpu_custom_call.1} parent=1 // pred_check
      _
    $region27: #{tpu_custom_call.1} parent=1 // pred_check_branch
      %50 = sbr.rel (0) target = $region29
    $region28: #{tpu_custom_call.1} parent=1 // pred_region
      _
    $region29: #{tpu_custom_call.1} parent=1 // pred_fallthru
      _
    // Predicated region
    $region30: #{tpu_custom_call.1} parent=1 // pred_check
      _
    $region31: #{tpu_custom_call.1} parent=1 // pred_check_branch
      %52 = sbr.rel (0) target = $region33
    $region32: #{tpu_custom_call.1} parent=1 // pred_region
      %54 = dma.done [#allocation3], 4096
    $region33: #{tpu_custom_call.1} parent=1 // pred_fallthru
      _
    // Predicated region
    $region34: #{tpu_custom_call.1} parent=1 // pred_check
      _
    $region35: #{tpu_custom_call.1} parent=1 // pred_check_branch
      %56 = sbr.rel (0) target = $region37
    $region36: #{tpu_custom_call.1} parent=1 // pred_region
      %58 = dma.done [#allocation6], 2048
    $region37: #{tpu_custom_call.1} parent=1 // pred_fallthru
      _
    %v59 = vld [vmem:[%s0] sm:$0xff]
    %v60 = vld [vmem:[%s1] sm:$0x3]
    %v61 = vld [vmem:[%s2] sm:$0x1]
    %v63 = vperm.slane %v61, 0
    %vm65 = vcmask 15360
    %v67 = vsel %vm65, %v59, 0
    %vm69 = vcmask 1041408
    %v71 = vsel %vm69, %v60, 0
    %73 = vmatpush.msra.mxu0 0.0
    %74 = vmatpush.msra.mxu0 0.0
    %75 = vmatpush.msra.mxu0 0.0
    %76 = vmatpush.msra.mxu0 0.0
    %77 = vmatpush.msra.mxu0 0.0
    %78 = vmatpush.msra.mxu0 0.0
    %79 = vmatpush.msra.mxu0 0.0
    %80 = vmatpush.msra.mxu0 0.0
    %81 = vmatpush.msra.mxu0 0.0
    %82 = vmatpush.msra.mxu0 0.0
    %83 = vmatpush.msra.mxu0 0.0
    %84 = vmatpush.msra.mxu0 0.0
    %85 = vmatpush.msra.mxu0 0.0
    %86 = vmatpush.msra.mxu0 0.0
    %87 = vmatpush.msra.mxu0 0.0
    %88 = vmatpush.msra.mxu0 %v71
    %89 = vmatmul.f32.gmra.mxu0 %v67
    %v90 = vpop.f32.mrf.mxu0
    %v91 = vadd.f32 %v63, %v90
    %92 = vdwg.mxu0
    %v93 = vtanh.pop %v91
    %v94 = vld [vmem:[#allocation2] sm:$0xff]
    %v95 = vld [vmem:[#allocation2 + $0x8] sm:$0xff]
    %v96 = vld [vmem:[#allocation2 + $0x10] sm:$0xff]
    %v97 = vld [vmem:[#allocation2 + $0x18] sm:$0xff]
    %v98 = vld [vmem:[#allocation2 + $0x20] sm:$0xff]
    %v99 = vld [vmem:[#allocation2 + $0x28] sm:$0xff]
    %v100 = vld [vmem:[#allocation2 + $0x30] sm:$0xff]
    %v101 = vld [vmem:[#allocation2 + $0x38] sm:$0xff]
    %v102 = vld [vmem:[#allocation2 + $0x40] sm:$0xff]
    %v103 = vld [vmem:[#allocation2 + $0x48] sm:$0xff]
    %v104 = vld [vmem:[#allocation2 + $0x50] sm:$0xff]
    %v105 = vld [vmem:[#allocation2 + $0x58] sm:$0xff]
    %v106 = vld [vmem:[#allocation2 + $0x60] sm:$0xff]
    %v107 = vld [vmem:[#allocation2 + $0x68] sm:$0xff]
    %v108 = vld [vmem:[#allocation2 + $0x70] sm:$0xff]
    %v109 = vld [vmem:[#allocation2 + $0x78] sm:$0xff]
    %v110 = vld [vmem:[%s4] sm:$0x1]
    %v112 = vperm.slane %v110, 0
    %114 = vmatpush.msra.mxu0 %v109
    %115 = vmatpush.msra.mxu0 %v108
    %116 = vmatpush.msra.mxu0 %v107
    %117 = vmatpush.msra.mxu0 %v106
    %118 = vmatpush.msra.mxu0 %v105
    %119 = vmatpush.msra.mxu0 %v104
    %120 = vmatpush.msra.mxu0 %v103
    %121 = vmatpush.msra.mxu0 %v102
    %122 = vmatpush.msra.mxu0 %v101
    %123 = vmatpush.msra.mxu0 %v100
    %124 = vmatpush.msra.mxu0 %v99
    %125 = vmatpush.msra.mxu0 %v98
    %126 = vmatpush.msra.mxu0 %v97
    %127 = vmatpush.msra.mxu0 %v96
    %128 = vmatpush.msra.mxu0 %v95
    %129 = vmatpush.msra.mxu0 %v94
    %130 = vmatmul.f32.gmra.mxu0 %v93
    %v131 = vpop.f32.mrf.mxu0
    %v132 = vadd.f32 %v112, %v131
    %133 = vdwg.mxu0
    %v134 = vtanh.pop %v132
    %s135 = scalar_lea.vmem [#allocation2], 128
    %v136 = vld [vmem:[%s135] sm:$0xff]
    %v137 = vld [vmem:[%s135 + $0x8] sm:$0xff]
    %v138 = vld [vmem:[%s135 + $0x10] sm:$0xff]
    %v139 = vld [vmem:[%s135 + $0x18] sm:$0xff]
    %v140 = vld [vmem:[%s135 + $0x20] sm:$0xff]
    %v141 = vld [vmem:[%s135 + $0x28] sm:$0xff]
    %v142 = vld [vmem:[%s135 + $0x30] sm:$0xff]
    %v143 = vld [vmem:[%s135 + $0x38] sm:$0xff]
    %v144 = vld [vmem:[%s135 + $0x40] sm:$0xff]
    %v145 = vld [vmem:[%s135 + $0x48] sm:$0xff]
    %v146 = vld [vmem:[%s135 + $0x50] sm:$0xff]
    %v147 = vld [vmem:[%s135 + $0x58] sm:$0xff]
    %v148 = vld [vmem:[%s135 + $0x60] sm:$0xff]
    %v149 = vld [vmem:[%s135 + $0x68] sm:$0xff]
    %v150 = vld [vmem:[%s135 + $0x70] sm:$0xff]
    %v151 = vld [vmem:[%s135 + $0x78] sm:$0xff]
    %s152 = scalar_lea.vmem %s4, 1
    %v153 = vld [vmem:[%s152] sm:$0x1]
    %v155 = vperm.slane %v153, 0
    %157 = vmatpush.msra.mxu0 %v151
    %158 = vmatpush.msra.mxu0 %v150
    %159 = vmatpush.msra.mxu0 %v149
    %160 = vmatpush.msra.mxu0 %v148
    %161 = vmatpush.msra.mxu0 %v147
    %162 = vmatpush.msra.mxu0 %v146
    %163 = vmatpush.msra.mxu0 %v145
    %164 = vmatpush.msra.mxu0 %v144
    %165 = vmatpush.msra.mxu0 %v143
    %166 = vmatpush.msra.mxu0 %v142
    %167 = vmatpush.msra.mxu0 %v141
    %168 = vmatpush.msra.mxu0 %v140
    %169 = vmatpush.msra.mxu0 %v139
    %170 = vmatpush.msra.mxu0 %v138
    %171 = vmatpush.msra.mxu0 %v137
    %172 = vmatpush.msra.mxu0 %v136
    %173 = vmatmul.f32.gmra.mxu0 %v134
    %v174 = vpop.f32.mrf.mxu0
    %v175 = vadd.f32 %v155, %v174
    %176 = vdwg.mxu0
    %v177 = vtanh.pop %v175
    %v178 = vld [vmem:[#allocation5] sm:$0xff]
    %v179 = vld [vmem:[#allocation5 + $0x8] sm:$0xff]
    %v180 = vld [vmem:[#allocation5 + $0x10] sm:$0xff]
    %v181 = vld [vmem:[#allocation5 + $0x18] sm:$0xff]
    %v182 = vld [vmem:[#allocation5 + $0x20] sm:$0xff]
    %v183 = vld [vmem:[#allocation5 + $0x28] sm:$0xff]
    %v184 = vld [vmem:[#allocation5 + $0x30] sm:$0xff]
    %v185 = vld [vmem:[#allocation5 + $0x38] sm:$0xff]
    %v186 = vld [vmem:[#allocation5 + $0x40] sm:$0xff]
    %v187 = vld [vmem:[#allocation5 + $0x48] sm:$0xff]
    %v188 = vld [vmem:[#allocation5 + $0x50] sm:$0xff]
    %v189 = vld [vmem:[#allocation5 + $0x58] sm:$0xff]
    %v190 = vld [vmem:[#allocation5 + $0x60] sm:$0xff]
    %v191 = vld [vmem:[#allocation5 + $0x68] sm:$0xff]
    %v192 = vld [vmem:[#allocation5 + $0x70] sm:$0xff]
    %v193 = vld [vmem:[#allocation5 + $0x78] sm:$0xff]
    %v194 = vld [vmem:[%s6] sm:$0x1]
    %v196 = vperm.slane %v194, 0
    %198 = vmatpush.msra.mxu0 %v193
    %199 = vmatpush.msra.mxu0 %v192
    %200 = vmatpush.msra.mxu0 %v191
    %201 = vmatpush.msra.mxu0 %v190
    %202 = vmatpush.msra.mxu0 %v189
    %203 = vmatpush.msra.mxu0 %v188
    %204 = vmatpush.msra.mxu0 %v187
    %205 = vmatpush.msra.mxu0 %v186
    %206 = vmatpush.msra.mxu0 %v185
    %207 = vmatpush.msra.mxu0 %v184
    %208 = vmatpush.msra.mxu0 %v183
    %209 = vmatpush.msra.mxu0 %v182
    %210 = vmatpush.msra.mxu0 %v181
    %211 = vmatpush.msra.mxu0 %v180
    %212 = vmatpush.msra.mxu0 %v179
    %213 = vmatpush.msra.mxu0 %v178
    %214 = vmatmul.f32.gmra.mxu0 %v177
    %v215 = vpop.f32.mrf.mxu0
    %v216 = vadd.f32 %v196, %v215
    %217 = vdwg.mxu0
    %218 = vst [vmem:[#allocation7] sm:$0xff] %v216
    // Predicated region
    $region38: #{tpu_custom_call.1} parent=1 // pred_check
      _
    $region39: #{tpu_custom_call.1} parent=1 // pred_check_branch
      %220 = sbr.rel (0) target = $region41
    $region40: #{tpu_custom_call.1} parent=1 // pred_region
      %222 = vsyncadd [#allocation4], 0
      %s224 = sshll.u32 [#allocation7], 4
      %s225 = int_to_ptr.vmem [resolvable:$true] %s224
      %s226 = sshll.u32 %s7, 4
      %s227 = int_to_ptr.hbm [resolvable:$true] %s226
      %229 = dma.vmem_to_hbm [thread:$0]  %s225, 128, %s227, [#allocation4]
    $region41: #{tpu_custom_call.1} parent=1 // pred_fallthru
      _
    // Predicated region
    $region42: #{tpu_custom_call.1} parent=1 // pred_check
      _
    $region43: #{tpu_custom_call.1} parent=1 // pred_check_branch
      %231 = sbr.rel (0) target = $region45
    $region44: #{tpu_custom_call.1} parent=1 // pred_region
      %233 = dma.done [#allocation4], 128
    $region45: #{tpu_custom_call.1} parent=1 // pred_fallthru
      _
    %234 = vsyncpa [#allocation3], 1
    %235 = vsyncpa [#allocation6], 1
    %236 = vsyncpa [#allocation4], 1

</llo_original>
